<compile_context>
chip_gen: v7x
topology: tpu7x:2x2x1
jax: 0.10.0
libtpu: 0.0.40
codegen_flags: <defaults>
</compile_context>

<pallas_src>
import math

import jax
import jax.numpy as jnp
from jax.experimental import pallas as pl
from jax.experimental.pallas import tpu as pltpu


def _round_up(x, m):
    return (x + m - 1) // m * m


def _cdiv(a, b):
    return (a + b - 1) // b


def _vmem_capacity_bytes():
    """Physical VMEM per TensorCore; conservative fallback if the query fails."""
    try:
        return int(pltpu.get_tpu_info().vmem_capacity_bytes)
    except Exception:
        return 64 * 1024 * 1024          # v7x per-TC size (smallest current part)


def _make_conv_kernel(kh, kw, sw, w_out):
    """Implicit-im2col kernel body: one (batch, O-tile, output row) per step.

    refs = (x_row_0 .. x_row_{kh-1}, w_taps, bias, out)
      x_row_ki : (1, 1, Wp, C_pad)       input row  ho*sh + ki  (NHWC, padded)
      w_taps   : (kh*kw, C_pad, tile_o)  folded weight, VMEM-resident
      bias     : (1, tile_o) fp32
      out      : (1, 1, Wo, tile_o)
    """

    def kernel(*refs):
        x_rows = refs[:kh]
        w_ref, b_ref, o_ref = refs[kh], refs[kh + 1], refs[kh + 2]
        tile_o = o_ref.shape[-1]

        # Register accumulator seeded with the bias: no zero-init, no fp32 VMEM
        # scratch, no epilogue add (review: single-K-step specialization).
        acc = jnp.broadcast_to(b_ref[...], (w_out, tile_o)).astype(jnp.float32)

        for ki in range(kh):
            row = x_rows[ki][0, 0]                            # (Wp, C_pad)
            for kj in range(kw):
                lhs = row[kj:kj + (w_out - 1) * sw + 1:sw, :]  # (Wo, C_pad)
                acc = acc + jnp.dot(lhs, w_ref[ki * kw + kj],
                                    preferred_element_type=jnp.float32)

        o_ref[0, 0] = acc.astype(o_ref.dtype)

    return kernel


def lora_conv2d_forward(x, w_base, b_base, w_lora_a, w_lora_b, *,
                        stride, padding, scaling,
                        compute_dtype=jnp.bfloat16,
                        out_dtype=jnp.float32,
                        out_layout="NCHW"):
    """x: (N, C, H, W) NCHW.  Returns (N, O, Ho, Wo), or (N, Ho, Wo, O) if NHWC."""
    N, C, H, W = x.shape
    O, _, kh, kw = w_base.shape
    r = w_lora_a.shape[0]
    sh, sw = stride
    ph, pw = padding
    Ho = (H + 2 * ph - kh) // sh + 1
    Wo = (W + 2 * pw - kw) // sw + 1
    K = C * kh * kw

    # ---- fold LoRA into the base weight (exact: dropout == Identity) --------
    # NOTE: casting the merged W_eff to bf16 can quantize away a LoRA delta much
    # smaller than the base weight; pass compute_dtype=jnp.float32 if that
    # fidelity matters (review correctness note).
    wb_t = w_base.reshape(O, K).T.astype(jnp.float32)            # (K, O)
    wa_t = w_lora_a.reshape(r, K).T.astype(jnp.float32)          # (K, r)
    wlb_t = w_lora_b.reshape(O, r).T.astype(jnp.float32)         # (r, O)
    w_eff = wb_t + jnp.float32(scaling) * (wa_t @ wlb_t)         # (K, O)

    # ---- padding / generation-aware tiling -----------------------------------
    in_bytes = jnp.dtype(compute_dtype).itemsize
    C_pad = _round_up(C, 8)
    O_pad = _round_up(O, 128)              # lane-dense stores / full MXU columns
    cap = _vmem_capacity_bytes()

    # Bound the VMEM-resident weight block (matters on 64 MiB v7x); otherwise
    # keep the whole O extent per step so the weight is DMA'd exactly once.
    w_budget = cap // 8
    tile_o, num_o = O_pad, 1
    while 2 * kh * kw * C_pad * tile_o * in_bytes > w_budget and tile_o > 128:
        num_o *= 2
        tile_o = _round_up(_cdiv(O_pad, num_o), 128)
    num_o = _cdiv(O_pad, tile_o)
    O_pad = num_o * tile_o

    # ---- folded weight as per-tap (C, O) slices; bias ------------------------
    # w_eff K-axis order is (C, kh, kw); regroup to taps indexed by ki*kw + kj.
    w_taps = (w_eff.reshape(C, kh, kw, O)
                   .transpose(1, 2, 0, 3)
                   .reshape(kh * kw, C, O))
    w_taps = jnp.pad(w_taps, ((0, 0), (0, C_pad - C), (0, O_pad - O)))
    w_taps = w_taps.astype(compute_dtype)

    if b_base is None:
        b_base = jnp.zeros((O,), jnp.float32)
    bias = jnp.pad(b_base.astype(jnp.float32), (0, O_pad - O)).reshape(1, O_pad)

    # ---- input: NHWC + spatial/channel padding (single cheap XLA pass) -------
    Hp, Wp = H + 2 * ph, W + 2 * pw
    x_pad = jnp.pad(jnp.transpose(x.astype(compute_dtype), (0, 2, 3, 1)),
                    ((0, 0), (ph, ph), (pw, pw), (0, C_pad - C)))

    # ---- VMEM footprint -> explicit scoped limit ------------------------------
    est = (2 * kh * Wp * C_pad * in_bytes                     # streamed input rows
           + 2 * kh * kw * C_pad * tile_o * in_bytes          # resident weight
           + 2 * 8 * tile_o * 4                               # bias
           + 2 * Wo * tile_o * jnp.dtype(out_dtype).itemsize  # output tile
           + Wo * tile_o * 4)                                 # accumulator headroom
    vmem_limit = int(min(cap * 3 // 4, max(4 * est + (8 << 20), 32 << 20)))

    # ---- pallas_call -----------------------------------------------------------
    # grid axes: batch, O tile, output row -- all independent (fully parallel;
    # no cross-step reduction, so v7x dual-TC sharding is safe).
    grid = (N, num_o, Ho)

    def _x_map(ki):
        # H block size is 1, so block index == element row: row = ho*sh + ki.
        return lambda n, oi, t, _ki=ki: (n, t * sh + _ki, 0, 0)

    in_specs = [pl.BlockSpec((1, 1, Wp, C_pad), _x_map(ki)) for ki in range(kh)]
    in_specs += [
        pl.BlockSpec((kh * kw, C_pad, tile_o), lambda n, oi, t: (0, 0, oi)),
        pl.BlockSpec((1, tile_o), lambda n, oi, t: (0, oi)),
    ]
    out_spec = pl.BlockSpec((1, 1, Wo, tile_o), lambda n, oi, t: (n, t, 0, oi))

    out = pl.pallas_call(
        _make_conv_kernel(kh, kw, sw, Wo),
        out_shape=jax.ShapeDtypeStruct((N, Ho, Wo, O_pad), out_dtype),
        grid_spec=pltpu.PrefetchScalarGridSpec(
            num_scalar_prefetch=0,
            grid=grid,
            in_specs=in_specs,
            out_specs=out_spec,
        ),
        compiler_params=pltpu.CompilerParams(
            dimension_semantics=("parallel", "parallel", "parallel"),
            vmem_limit_bytes=vmem_limit),
    )(*([x_pad] * kh), w_taps, bias)

    out = out[:, :, :, :O]                        # drop O padding (NHWC layout)
    if out_layout == "NHWC":
        return out                                # consumers can skip the transpose
    return jnp.transpose(out, (0, 3, 1, 2))       # NCHW (module semantics)


def _reference(x, w_base, b_base, w_lora_a, w_lora_b, *, stride, padding, scaling):
    """Pure-JAX reference (lax conv) mirroring the PyTorch forward."""
    dn = jax.lax.conv_dimension_numbers(x.shape, w_base.shape, ("NCHW", "OIHW", "NCHW"))
    pad = [(padding[0], padding[0]), (padding[1], padding[1])]
    base = jax.lax.conv_general_dilated(x, w_base, stride, pad, dimension_numbers=dn)
    base = base + b_base.reshape(1, -1, 1, 1)
    a = jax.lax.conv_general_dilated(x, w_lora_a, stride, pad, dimension_numbers=dn)
    dn2 = jax.lax.conv_dimension_numbers(a.shape, w_lora_b.shape, ("NCHW", "OIHW", "NCHW"))
    b = jax.lax.conv_general_dilated(a, w_lora_b, (1, 1), [(0, 0), (0, 0)],
                                     dimension_numbers=dn2)
    return base + scaling * b


if __name__ == "__main__":
    # Module config (synthetic, deterministic).
    N, C, H, W = 2, 4, 16, 16          # input NCHW
    O = 8                              # base_layer out_channels
    kh, kw = 3, 3
    stride = (1, 1)
    padding = (1, 1)
    r = 4
    lora_alpha = 8
    scaling = lora_alpha / r           # 2.0

    key = jax.random.PRNGKey(0)
    k_x, k_wb, k_bb, k_wa, k_wlb = jax.random.split(key, 5)

    x = jax.random.normal(k_x, (N, C, H, W), dtype=jnp.float32)

    fan_in = C * kh * kw
    bound = 1.0 / math.sqrt(fan_in)
    w_base = jax.random.uniform(k_wb, (O, C, kh, kw), jnp.float32, -bound, bound)
    b_base = jax.random.uniform(k_bb, (O,), jnp.float32, -bound, bound)

    # LoRA weights.  NOTE: the module's default init zeros lora_B (adapter is a
    # no-op at step 0); non-zero values here actually exercise the LoRA path.
    w_lora_a = jax.random.uniform(k_wa, (r, C, kh, kw), jnp.float32,
                                  -math.sqrt(5) * bound, math.sqrt(5) * bound)
    w_lora_b = jax.random.normal(k_wlb, (O, r, 1, 1), dtype=jnp.float32) * 0.1

    ref = _reference(x, w_base, b_base, w_lora_a, w_lora_b,
                     stride=stride, padding=padding, scaling=scaling)

    # fp32 operands: should match the fp32 reference tightly.
    out_f32 = lora_conv2d_forward(x, w_base, b_base, w_lora_a, w_lora_b,
                                  stride=stride, padding=padding, scaling=scaling,
                                  compute_dtype=jnp.float32)
    out_f32 = jax.block_until_ready(out_f32)
    assert out_f32.shape == (N, O, H, W), out_f32.shape
    assert jnp.allclose(out_f32, ref, atol=2e-4, rtol=2e-4), \
        float(jnp.max(jnp.abs(out_f32 - ref)))

    # bf16 operands (default, MXU-native): relaxed tolerance vs fp32 reference.
    out_bf16 = lora_conv2d_forward(x, w_base, b_base, w_lora_a, w_lora_b,
                                   stride=stride, padding=padding, scaling=scaling)
    out_bf16 = jax.block_until_ready(out_bf16)
    assert out_bf16.shape == (N, O, H, W), out_bf16.shape
    assert jnp.allclose(out_bf16, ref, atol=1.2e-1, rtol=5e-2), \
        float(jnp.max(jnp.abs(out_bf16 - ref)))

    # TODO(synk): dropout (p>0), the DoRA path, mixed-batch `adapter_names`, and
    # dilation/groups != 1 are not implemented (module defaults: Identity
    # dropout, no DoRA, single unmerged adapter, dilation=1, groups=1).
    print("KERNEL_OK")
</pallas_src>

<mosaic_0001>
module attributes {stable_mosaic.version = 11 : i64} {
  func.func @kernel(%arg0: i32, %arg1: i32, %arg2: i32, %arg3: memref<1x1x18x8xf32, #tpu.memory_space<vmem>>, %arg4: memref<1x1x18x8xf32, #tpu.memory_space<vmem>>, %arg5: memref<1x1x18x8xf32, #tpu.memory_space<vmem>>, %arg6: memref<9x8x128xf32, #tpu.memory_space<vmem>>, %arg7: memref<1x128xf32, #tpu.memory_space<vmem>>, %arg8: memref<1x1x16x128xf32, #tpu.memory_space<vmem>>) attributes {dimension_semantics = [#tpu.dimension_semantics<parallel>, #tpu.dimension_semantics<parallel>, #tpu.dimension_semantics<parallel>], iteration_bounds = array<i64: 2, 1, 16>, scalar_prefetch = 0 : i64, scratch_operands = 0 : i64, tpu.core_type = #tpu.core_type<tc>, window_params = [{transform_indices = @transform_0, window_bounds = array<i64: 1, 1, 18, 8>}, {transform_indices = @transform_1, window_bounds = array<i64: 1, 1, 18, 8>}, {transform_indices = @transform_2, window_bounds = array<i64: 1, 1, 18, 8>}, {transform_indices = @transform_3, window_bounds = array<i64: 9, 8, 128>}, {transform_indices = @transform_4, window_bounds = array<i64: 1, 128>}, {transform_indices = @transform_5, window_bounds = array<i64: 1, 1, 16, 128>}]} {
    %c0 = arith.constant 0 : index
    %c0_0 = arith.constant 0 : index
    %0 = vector.load %arg7[%c0, %c0_0] : memref<1x128xf32, #tpu.memory_space<vmem>>, vector<1x128xf32>
    %1 = vector.shape_cast %0 : vector<1x128xf32> to vector<1x128xf32>
    %2 = vector.broadcast %1 : vector<1x128xf32> to vector<16x128xf32>
    %c0_1 = arith.constant 0 : index
    %c0_2 = arith.constant 0 : index
    %c0_3 = arith.constant 0 : index
    %c0_4 = arith.constant 0 : index
    %3 = vector.load %arg3[%c0_1, %c0_2, %c0_3, %c0_4] : memref<1x1x18x8xf32, #tpu.memory_space<vmem>>, vector<1x1x18x8xf32>
    %4 = vector.shape_cast %3 : vector<1x1x18x8xf32> to vector<18x8xf32>
    %5 = vector.extract_strided_slice %4 {offsets = [0, 0], sizes = [16, 8], strides = [1, 1]} : vector<18x8xf32> to vector<16x8xf32>
    %c0_5 = arith.constant 0 : index
    %c0_6 = arith.constant 0 : index
    %c0_7 = arith.constant 0 : index
    %6 = vector.load %arg6[%c0_5, %c0_6, %c0_7] : memref<9x8x128xf32, #tpu.memory_space<vmem>>, vector<1x8x128xf32>
    %7 = vector.shape_cast %6 : vector<1x8x128xf32> to vector<8x128xf32>
    %cst = arith.constant dense<0.000000e+00> : vector<16x128xf32>
    %8 = tpu.matmul %5, %7, %cst {dimension_numbers = #tpu.dot_dimension_numbers<[1], [0], [0], [1], [0, 0, 1, 1], [], []>} : vector<16x8xf32>, vector<8x128xf32>, vector<16x128xf32> -> vector<16x128xf32>
    %9 = arith.addf %2, %8 : vector<16x128xf32>
    %10 = vector.extract_strided_slice %4 {offsets = [1, 0], sizes = [16, 8], strides = [1, 1]} : vector<18x8xf32> to vector<16x8xf32>
    %c1 = arith.constant 1 : index
    %c0_8 = arith.constant 0 : index
    %c0_9 = arith.constant 0 : index
    %11 = vector.load %arg6[%c1, %c0_8, %c0_9] : memref<9x8x128xf32, #tpu.memory_space<vmem>>, vector<1x8x128xf32>
    %12 = vector.shape_cast %11 : vector<1x8x128xf32> to vector<8x128xf32>
    %cst_10 = arith.constant dense<0.000000e+00> : vector<16x128xf32>
    %13 = tpu.matmul %10, %12, %cst_10 {dimension_numbers = #tpu.dot_dimension_numbers<[1], [0], [0], [1], [0, 0, 1, 1], [], []>} : vector<16x8xf32>, vector<8x128xf32>, vector<16x128xf32> -> vector<16x128xf32>
    %14 = arith.addf %9, %13 : vector<16x128xf32>
    %15 = vector.extract_strided_slice %4 {offsets = [2, 0], sizes = [16, 8], strides = [1, 1]} : vector<18x8xf32> to vector<16x8xf32>
    %c2 = arith.constant 2 : index
    %c0_11 = arith.constant 0 : index
    %c0_12 = arith.constant 0 : index
    %16 = vector.load %arg6[%c2, %c0_11, %c0_12] : memref<9x8x128xf32, #tpu.memory_space<vmem>>, vector<1x8x128xf32>
    %17 = vector.shape_cast %16 : vector<1x8x128xf32> to vector<8x128xf32>
    %cst_13 = arith.constant dense<0.000000e+00> : vector<16x128xf32>
    %18 = tpu.matmul %15, %17, %cst_13 {dimension_numbers = #tpu.dot_dimension_numbers<[1], [0], [0], [1], [0, 0, 1, 1], [], []>} : vector<16x8xf32>, vector<8x128xf32>, vector<16x128xf32> -> vector<16x128xf32>
    %19 = arith.addf %14, %18 : vector<16x128xf32>
    %c0_14 = arith.constant 0 : index
    %c0_15 = arith.constant 0 : index
    %c0_16 = arith.constant 0 : index
    %c0_17 = arith.constant 0 : index
    %20 = vector.load %arg4[%c0_14, %c0_15, %c0_16, %c0_17] : memref<1x1x18x8xf32, #tpu.memory_space<vmem>>, vector<1x1x18x8xf32>
    %21 = vector.shape_cast %20 : vector<1x1x18x8xf32> to vector<18x8xf32>
    %22 = vector.extract_strided_slice %21 {offsets = [0, 0], sizes = [16, 8], strides = [1, 1]} : vector<18x8xf32> to vector<16x8xf32>
    %c3 = arith.constant 3 : index
    %c0_18 = arith.constant 0 : index
    %c0_19 = arith.constant 0 : index
    %23 = vector.load %arg6[%c3, %c0_18, %c0_19] : memref<9x8x128xf32, #tpu.memory_space<vmem>>, vector<1x8x128xf32>
    %24 = vector.shape_cast %23 : vector<1x8x128xf32> to vector<8x128xf32>
    %cst_20 = arith.constant dense<0.000000e+00> : vector<16x128xf32>
    %25 = tpu.matmul %22, %24, %cst_20 {dimension_numbers = #tpu.dot_dimension_numbers<[1], [0], [0], [1], [0, 0, 1, 1], [], []>} : vector<16x8xf32>, vector<8x128xf32>, vector<16x128xf32> -> vector<16x128xf32>
    %26 = arith.addf %19, %25 : vector<16x128xf32>
    %27 = vector.extract_strided_slice %21 {offsets = [1, 0], sizes = [16, 8], strides = [1, 1]} : vector<18x8xf32> to vector<16x8xf32>
    %c4 = arith.constant 4 : index
    %c0_21 = arith.constant 0 : index
    %c0_22 = arith.constant 0 : index
    %28 = vector.load %arg6[%c4, %c0_21, %c0_22] : memref<9x8x128xf32, #tpu.memory_space<vmem>>, vector<1x8x128xf32>
    %29 = vector.shape_cast %28 : vector<1x8x128xf32> to vector<8x128xf32>
    %cst_23 = arith.constant dense<0.000000e+00> : vector<16x128xf32>
    %30 = tpu.matmul %27, %29, %cst_23 {dimension_numbers = #tpu.dot_dimension_numbers<[1], [0], [0], [1], [0, 0, 1, 1], [], []>} : vector<16x8xf32>, vector<8x128xf32>, vector<16x128xf32> -> vector<16x128xf32>
    %31 = arith.addf %26, %30 : vector<16x128xf32>
    %32 = vector.extract_strided_slice %21 {offsets = [2, 0], sizes = [16, 8], strides = [1, 1]} : vector<18x8xf32> to vector<16x8xf32>
    %c5 = arith.constant 5 : index
    %c0_24 = arith.constant 0 : index
    %c0_25 = arith.constant 0 : index
    %33 = vector.load %arg6[%c5, %c0_24, %c0_25] : memref<9x8x128xf32, #tpu.memory_space<vmem>>, vector<1x8x128xf32>
    %34 = vector.shape_cast %33 : vector<1x8x128xf32> to vector<8x128xf32>
    %cst_26 = arith.constant dense<0.000000e+00> : vector<16x128xf32>
    %35 = tpu.matmul %32, %34, %cst_26 {dimension_numbers = #tpu.dot_dimension_numbers<[1], [0], [0], [1], [0, 0, 1, 1], [], []>} : vector<16x8xf32>, vector<8x128xf32>, vector<16x128xf32> -> vector<16x128xf32>
    %36 = arith.addf %31, %35 : vector<16x128xf32>
    %c0_27 = arith.constant 0 : index
    %c0_28 = arith.constant 0 : index
    %c0_29 = arith.constant 0 : index
    %c0_30 = arith.constant 0 : index
    %37 = vector.load %arg5[%c0_27, %c0_28, %c0_29, %c0_30] : memref<1x1x18x8xf32, #tpu.memory_space<vmem>>, vector<1x1x18x8xf32>
    %38 = vector.shape_cast %37 : vector<1x1x18x8xf32> to vector<18x8xf32>
    %39 = vector.extract_strided_slice %38 {offsets = [0, 0], sizes = [16, 8], strides = [1, 1]} : vector<18x8xf32> to vector<16x8xf32>
    %c6 = arith.constant 6 : index
    %c0_31 = arith.constant 0 : index
    %c0_32 = arith.constant 0 : index
    %40 = vector.load %arg6[%c6, %c0_31, %c0_32] : memref<9x8x128xf32, #tpu.memory_space<vmem>>, vector<1x8x128xf32>
    %41 = vector.shape_cast %40 : vector<1x8x128xf32> to vector<8x128xf32>
    %cst_33 = arith.constant dense<0.000000e+00> : vector<16x128xf32>
    %42 = tpu.matmul %39, %41, %cst_33 {dimension_numbers = #tpu.dot_dimension_numbers<[1], [0], [0], [1], [0, 0, 1, 1], [], []>} : vector<16x8xf32>, vector<8x128xf32>, vector<16x128xf32> -> vector<16x128xf32>
    %43 = arith.addf %36, %42 : vector<16x128xf32>
    %44 = vector.extract_strided_slice %38 {offsets = [1, 0], sizes = [16, 8], strides = [1, 1]} : vector<18x8xf32> to vector<16x8xf32>
    %c7 = arith.constant 7 : index
    %c0_34 = arith.constant 0 : index
    %c0_35 = arith.constant 0 : index
    %45 = vector.load %arg6[%c7, %c0_34, %c0_35] : memref<9x8x128xf32, #tpu.memory_space<vmem>>, vector<1x8x128xf32>
    %46 = vector.shape_cast %45 : vector<1x8x128xf32> to vector<8x128xf32>
    %cst_36 = arith.constant dense<0.000000e+00> : vector<16x128xf32>
    %47 = tpu.matmul %44, %46, %cst_36 {dimension_numbers = #tpu.dot_dimension_numbers<[1], [0], [0], [1], [0, 0, 1, 1], [], []>} : vector<16x8xf32>, vector<8x128xf32>, vector<16x128xf32> -> vector<16x128xf32>
    %48 = arith.addf %43, %47 : vector<16x128xf32>
    %49 = vector.extract_strided_slice %38 {offsets = [2, 0], sizes = [16, 8], strides = [1, 1]} : vector<18x8xf32> to vector<16x8xf32>
    %c8 = arith.constant 8 : index
    %c0_37 = arith.constant 0 : index
    %c0_38 = arith.constant 0 : index
    %50 = vector.load %arg6[%c8, %c0_37, %c0_38] : memref<9x8x128xf32, #tpu.memory_space<vmem>>, vector<1x8x128xf32>
    %51 = vector.shape_cast %50 : vector<1x8x128xf32> to vector<8x128xf32>
    %cst_39 = arith.constant dense<0.000000e+00> : vector<16x128xf32>
    %52 = tpu.matmul %49, %51, %cst_39 {dimension_numbers = #tpu.dot_dimension_numbers<[1], [0], [0], [1], [0, 0, 1, 1], [], []>} : vector<16x8xf32>, vector<8x128xf32>, vector<16x128xf32> -> vector<16x128xf32>
    %53 = arith.addf %48, %52 : vector<16x128xf32>
    %c0_40 = arith.constant 0 : index
    %c0_41 = arith.constant 0 : index
    %c0_42 = arith.constant 0 : index
    %c0_43 = arith.constant 0 : index
    %54 = vector.load %arg8[%c0_40, %c0_41, %c0_42, %c0_43] : memref<1x1x16x128xf32, #tpu.memory_space<vmem>>, vector<1x1x16x128xf32>
    %55 = vector.shape_cast %54 : vector<1x1x16x128xf32> to vector<16x128xf32>
    %56 = vector.shape_cast %53 : vector<16x128xf32> to vector<1x1x16x128xf32>
    tpu.vector_store %arg8[%c0_40, %c0_41, %c0_42, %c0_43], %56 {strides = array<i32>} : memref<1x1x16x128xf32, #tpu.memory_space<vmem>>, vector<1x1x16x128xf32>,
    return
  }
  func.func @transform_0(%arg0: i32, %arg1: i32, %arg2: i32) -> (i32, i32, i32, i32) {
    %c1_i32 = arith.constant 1 : i32
    %0 = arith.muli %arg2, %c1_i32 : i32
    %c0_i32 = arith.constant 0 : i32
    %1 = arith.addi %0, %c0_i32 : i32
    %c0_i32_0 = arith.constant 0 : i32
    %c0_i32_1 = arith.constant 0 : i32
    %c0_i32_2 = arith.constant 0 : i32
    return %arg0, %1, %c0_i32_0, %c0_i32_1 : i32, i32, i32, i32
  }
  func.func @transform_1(%arg0: i32, %arg1: i32, %arg2: i32) -> (i32, i32, i32, i32) {
    %c1_i32 = arith.constant 1 : i32
    %0 = arith.muli %arg2, %c1_i32 : i32
    %c1_i32_0 = arith.constant 1 : i32
    %1 = arith.addi %0, %c1_i32_0 : i32
    %c0_i32 = arith.constant 0 : i32
    %c0_i32_1 = arith.constant 0 : i32
    %c0_i32_2 = arith.constant 0 : i32
    return %arg0, %1, %c0_i32, %c0_i32_1 : i32, i32, i32, i32
  }
  func.func @transform_2(%arg0: i32, %arg1: i32, %arg2: i32) -> (i32, i32, i32, i32) {
    %c1_i32 = arith.constant 1 : i32
    %0 = arith.muli %arg2, %c1_i32 : i32
    %c2_i32 = arith.constant 2 : i32
    %1 = arith.addi %0, %c2_i32 : i32
    %c0_i32 = arith.constant 0 : i32
    %c0_i32_0 = arith.constant 0 : i32
    %c0_i32_1 = arith.constant 0 : i32
    return %arg0, %1, %c0_i32, %c0_i32_0 : i32, i32, i32, i32
  }
  func.func @transform_3(%arg0: i32, %arg1: i32, %arg2: i32) -> (i32, i32, i32) {
    %c0_i32 = arith.constant 0 : i32
    %c0_i32_0 = arith.constant 0 : i32
    %c0_i32_1 = arith.constant 0 : i32
    return %c0_i32, %c0_i32_0, %arg1 : i32, i32, i32
  }
  func.func @transform_4(%arg0: i32, %arg1: i32, %arg2: i32) -> (i32, i32) {
    %c0_i32 = arith.constant 0 : i32
    %c0_i32_0 = arith.constant 0 : i32
    return %c0_i32, %arg1 : i32, i32
  }
  func.func @transform_5(%arg0: i32, %arg1: i32, %arg2: i32) -> (i32, i32, i32, i32) {
    %c0_i32 = arith.constant 0 : i32
    %c0_i32_0 = arith.constant 0 : i32
    return %arg0, %arg2, %c0_i32, %arg1 : i32, i32, i32, i32
  }
}

</mosaic_0001>

<llo_original>
// kernel: tpu_custom_call.1
$region0: #{tpu_custom_call.1}
  #allocation0 [shape = 'u32[]', space=smem, size = 0x4, offset = 0x4, fixed_abs, tag = 'smem constant byte address 0x4 - core index']
  #allocation1 [shape = 'u32[144,128]{1,0:T(1,128)}', space=vmem, size = 0x12000, scoped, tag = 'internal scratch']
  %s0 = inlined_call_operand.vmem [shape: f32[2,18,18,8], index: 0, kind: input, shape index: {}]
  %s1 = inlined_call_operand.vmem [shape: f32[2,18,18,8], index: 1, kind: input, shape index: {}]
  %s2 = inlined_call_operand.vmem [shape: f32[2,18,18,8], index: 2, kind: input, shape index: {}]
  %s3 = inlined_call_operand.vmem [shape: f32[9,8,128], index: 3, kind: input, shape index: {}]
  %s4 = inlined_call_operand.vmem [shape: f32[1,128], index: 4, kind: input, shape index: {}]
  %s5 = inlined_call_operand.hbm [shape: f32[2,16,16,128], index: 5, kind: output, shape index: {}]
  %s6 = sld [smem:[#allocation0]]
  $region53: #{tpu_custom_call.1} parent=0
    _
  %s8 = ssub.s32 1, %s6
  %s9 = scalar_select 0, %s8, %s6
  $region1: #{tpu_custom_call.1} parent=0
    #allocation2 [shape = 'u8[16384]{0}', space=vmem, size = 0x4000, scoped, tag = 'output window, operand 0']
    #allocation3 [shape = 's32[2]{0}', space=sflag, size = 0x8, scoped, tag = 'scoped memory for tpu_custom_call.1']
    %10 = vsyncpa [#allocation3], 0
    %s11 = scalar_lea.sflag [#allocation3], 1
    %12 = vsyncpa %s11, 0
    loop: start=0, step=1, limit=34
    $region2: #{tpu_custom_call.1} parent=1 // loop_pre_header
      _
    $region3: #{tpu_custom_call.1} parent=1 // loop_header
      %s14 = sphi 0, %s18
      %p15 = scmp.ge.s32.totalorder %s14, 34
      %s21 = sphi 0, %s40
      %s22 = sphi 0, %s36
      %s23 = sphi 0, %s32
      %s24 = sphi 0, %s21
      %s25 = sphi 0, %s22
      %s26 = sphi 0, %s23
      %s27 = sphi 0, %s24
      %s28 = sphi 0, %s25
      %s29 = sphi 0, %s26
      %s45 = sphi 0, %s47
      %s48 = sphi 0, %s45
      %s49 = sphi 0, %s48
      %s65 = sphi 0, %s49
      %s75 = sphi 0, %s77
      %s78 = sphi 0, %s75
      %s79 = sphi 0, %s78
      %s95 = sphi 0, %s79
      %s105 = sphi 0, %s107
      %s108 = sphi 0, %s105
      %s109 = sphi 0, %s108
      %s125 = sphi 0, %s109
      %s131 = sphi 0, %s133
      %s134 = sphi 0, %s131
      %s135 = sphi 0, %s134
      %s151 = sphi 0, %s135
      %s157 = sphi 0, %s159
      %s160 = sphi 0, %s157
      %s161 = sphi 0, %s160
      %s177 = sphi 0, %s161
      %s187 = sphi 0, %s189
      %s190 = sphi 0, %s187
      %s191 = sphi 0, %s190
      %s207 = sphi 0, %s191
    $region4: #{tpu_custom_call.1} parent=1 // loop_header_branch
      %17 = sbr.rel (%p15) target = $region8
    $region5: #{tpu_custom_call.1} parent=1 // loop_body
      %s19 = ssub.s32 %s14, 1
      %s20 = ssub.s32 %s14, 2
      %s30 = sadd.s32 1, %s23
      %p31 = scmp.ge.s32.totalorder %s30, 16
      %s32 = scalar_select %p31, 0, %s30
      %s33 = sadd.s32 1, %s22
      %s34 = scalar_select %p31, %s33, %s22
      %p35 = scmp.ge.s32.totalorder %s34, 1
      %s36 = scalar_select %p35, 0, %s34
      %s37 = sadd.s32 1, %s21
      %s38 = scalar_select %p35, %s37, %s21
      %p39 = scmp.ge.s32.totalorder %s38, 2
      %s40 = scalar_select %p39, 0, %s38
      %s41 = ssub.s32 %s21, %s40
      %s42 = ssub.s32 %s23, %s32
      %s43 = sor.u32 %s41, %s42
      %p44 = scmp.eq.s32.totalorder %s43, 0
      %s46 = sadd.s32 %s45, 1
      %s47 = scalar_select %p44, %s45, %s46
      %p50 = pneg %p44
      %p51 = scmp.eq.s32.totalorder %s14, 31
      %p52 = por %p50, %p51
      %p53 = scmp.ne.s32.totalorder %s45, %s48
      %p54 = scmp.eq.s32.totalorder %s14, 0
      %p55 = por %p53, %p54
      %p56 = scmp.ne.s32.totalorder %s45, %s48
      %p57 = scmp.eq.s32.totalorder %s19, 31
      %p58 = por %p56, %p57
      %p59 = scmp.ne.s32.totalorder %s48, %s49
      %p60 = scmp.eq.s32.totalorder %s19, 0
      %p61 = por %p59, %p60
      %p62 = scmp.ne.s32.totalorder %s48, %s49
      %p63 = scmp.eq.s32.totalorder %s20, 31
      %p64 = por %p62, %p63
      %p66 = scmp.ne.s32.totalorder %s49, %s65
      %p67 = scmp.eq.s32.totalorder %s20, 0
      %p68 = por %p66, %p67
      %s69 = sadd.s32 %s23, 1
      %s70 = sadd.s32 %s32, 1
      %s71 = ssub.s32 %s21, %s40
      %s72 = ssub.s32 %s69, %s70
      %s73 = sor.u32 %s71, %s72
      %p74 = scmp.eq.s32.totalorder %s73, 0
      %s76 = sadd.s32 %s75, 1
      %s77 = scalar_select %p74, %s75, %s76
      %p80 = pneg %p74
      %p81 = scmp.eq.s32.totalorder %s14, 31
      %p82 = por %p80, %p81
      %p83 = scmp.ne.s32.totalorder %s75, %s78
      %p84 = scmp.eq.s32.totalorder %s14, 0
      %p85 = por %p83, %p84
      %p86 = scmp.ne.s32.totalorder %s75, %s78
      %p87 = scmp.eq.s32.totalorder %s19, 31
      %p88 = por %p86, %p87
      %p89 = scmp.ne.s32.totalorder %s78, %s79
      %p90 = scmp.eq.s32.totalorder %s19, 0
      %p91 = por %p89, %p90
      %p92 = scmp.ne.s32.totalorder %s78, %s79
      %p93 = scmp.eq.s32.totalorder %s20, 31
      %p94 = por %p92, %p93
      %p96 = scmp.ne.s32.totalorder %s79, %s95
      %p97 = scmp.eq.s32.totalorder %s20, 0
      %p98 = por %p96, %p97
      %s99 = sadd.s32 %s23, 2
      %s100 = sadd.s32 %s32, 2
      %s101 = ssub.s32 %s21, %s40
      %s102 = ssub.s32 %s99, %s100
      %s103 = sor.u32 %s101, %s102
      %p104 = scmp.eq.s32.totalorder %s103, 0
      %s106 = sadd.s32 %s105, 1
      %s107 = scalar_select %p104, %s105, %s106
      %p110 = pneg %p104
      %p111 = scmp.eq.s32.totalorder %s14, 31
      %p112 = por %p110, %p111
      %p113 = scmp.ne.s32.totalorder %s105, %s108
      %p114 = scmp.eq.s32.totalorder %s14, 0
      %p115 = por %p113, %p114
      %p116 = scmp.ne.s32.totalorder %s105, %s108
      %p117 = scmp.eq.s32.totalorder %s19, 31
      %p118 = por %p116, %p117
      %p119 = scmp.ne.s32.totalorder %s108, %s109
      %p120 = scmp.eq.s32.totalorder %s19, 0
      %p121 = por %p119, %p120
      %p122 = scmp.ne.s32.totalorder %s108, %s109
      %p123 = scmp.eq.s32.totalorder %s20, 31
      %p124 = por %p122, %p123
      %p126 = scmp.ne.s32.totalorder %s109, %s125
      %p127 = scmp.eq.s32.totalorder %s20, 0
      %p128 = por %p126, %p127
      %s129 = ssub.s32 %s22, %s36
      %p130 = scmp.eq.s32.totalorder %s129, 0
      %s132 = sadd.s32 %s131, 1
      %s133 = scalar_select %p130, %s131, %s132
      %p136 = pneg %p130
      %p137 = scmp.eq.s32.totalorder %s14, 31
      %p138 = por %p136, %p137
      %p139 = scmp.ne.s32.totalorder %s131, %s134
      %p140 = scmp.eq.s32.totalorder %s14, 0
      %p141 = por %p139, %p140
      %p142 = scmp.ne.s32.totalorder %s131, %s134
      %p143 = scmp.eq.s32.totalorder %s19, 31
      %p144 = por %p142, %p143
      %p145 = scmp.ne.s32.totalorder %s134, %s135
      %p146 = scmp.eq.s32.totalorder %s19, 0
      %p147 = por %p145, %p146
      %p148 = scmp.ne.s32.totalorder %s134, %s135
      %p149 = scmp.eq.s32.totalorder %s20, 31
      %p150 = por %p148, %p149
      %p152 = scmp.ne.s32.totalorder %s135, %s151
      %p153 = scmp.eq.s32.totalorder %s20, 0
      %p154 = por %p152, %p153
      %s155 = ssub.s32 %s22, %s36
      %p156 = scmp.eq.s32.totalorder %s155, 0
      %s158 = sadd.s32 %s157, 1
      %s159 = scalar_select %p156, %s157, %s158
      %p162 = pneg %p156
      %p163 = scmp.eq.s32.totalorder %s14, 31
      %p164 = por %p162, %p163
      %p165 = scmp.ne.s32.totalorder %s157, %s160
      %p166 = scmp.eq.s32.totalorder %s14, 0
      %p167 = por %p165, %p166
      %p168 = scmp.ne.s32.totalorder %s157, %s160
      %p169 = scmp.eq.s32.totalorder %s19, 31
      %p170 = por %p168, %p169
      %p171 = scmp.ne.s32.totalorder %s160, %s161
      %p172 = scmp.eq.s32.totalorder %s19, 0
      %p173 = por %p171, %p172
      %p174 = scmp.ne.s32.totalorder %s160, %s161
      %p175 = scmp.eq.s32.totalorder %s20, 31
      %p176 = por %p174, %p175
      %p178 = scmp.ne.s32.totalorder %s161, %s177
      %p179 = scmp.eq.s32.totalorder %s20, 0
      %p180 = por %p178, %p179
      %s181 = ssub.s32 %s21, %s40
      %s182 = ssub.s32 %s23, %s32
      %s183 = sor.u32 %s181, %s182
      %s184 = ssub.s32 %s22, %s36
      %s185 = sor.u32 %s183, %s184
      %p186 = scmp.eq.s32.totalorder %s185, 0
      %s188 = sadd.s32 %s187, 1
      %s189 = scalar_select %p186, %s187, %s188
      %p192 = pneg %p186
      %p193 = scmp.eq.s32.totalorder %s14, 31
      %p194 = por %p192, %p193
      %p195 = scmp.ne.s32.totalorder %s187, %s190
      %p196 = scmp.eq.s32.totalorder %s14, 0
      %p197 = por %p195, %p196
      %p198 = scmp.ne.s32.totalorder %s187, %s190
      %p199 = scmp.eq.s32.totalorder %s19, 31
      %p200 = por %p198, %p199
      %p201 = scmp.ne.s32.totalorder %s190, %s191
      %p202 = scmp.eq.s32.totalorder %s19, 0
      %p203 = por %p201, %p202
      %p204 = scmp.ne.s32.totalorder %s190, %s191
      %p205 = scmp.eq.s32.totalorder %s20, 31
      %p206 = por %p204, %p205
      %p208 = scmp.ne.s32.totalorder %s191, %s207
      %p209 = scmp.eq.s32.totalorder %s20, 0
      %p210 = por %p208, %p209
      %p211 = scmp.le.s32.totalorder 1, %s14
      %p212 = scmp.lt.s32.totalorder %s14, 33
      %p213 = pnand %p211, %p212
      %p214 = pneg %p213
      // Predicated region
      $region9: #{tpu_custom_call.1} parent=5 // pred_check
        _
      $region10: #{tpu_custom_call.1} parent=5 // pred_check_branch
        %216 = sbr.rel (%p213) target = $region12
      $region11: #{tpu_custom_call.1} parent=5 // pred_region
        %s217 = ssub.s32 %s14, 1
        // Predicated region
        $region13: #{tpu_custom_call.1} parent=11 // pred_check
          %p218 = pneg %p147
        $region14: #{tpu_custom_call.1} parent=11 // pred_check_branch
          %220 = sbr.rel (%p218) target = $region16
        $region15: #{tpu_custom_call.1} parent=11 // pred_region
          %p221 = scmp.lt.s32.totalorder %s25, 0
          %s222 = scalar_select %p221, %s25, 0
          %s223 = smul.addr %s222, 8
          %s224 = scalar_lea.vmem %s3, %s223
        $region16: #{tpu_custom_call.1} parent=11 // pred_fallthru
          _
        // Predicated region
        $region17: #{tpu_custom_call.1} parent=11 // pred_check
          %p225 = pneg %p173
        $region18: #{tpu_custom_call.1} parent=11 // pred_check_branch
          %227 = sbr.rel (%p225) target = $region20
        $region19: #{tpu_custom_call.1} parent=11 // pred_region
          %p228 = scmp.lt.s32.totalorder %s25, 0
          %s229 = scalar_select %p228, %s25, 0
          %s230 = scalar_lea.vmem %s4, %s229
        $region20: #{tpu_custom_call.1} parent=11 // pred_fallthru
          _
      $region12: #{tpu_custom_call.1} parent=5 // pred_fallthru
        _
      %p231 = scmp.lt.s32.totalorder %s14, 32
      // Predicated region
      $region21: #{tpu_custom_call.1} parent=5 // pred_check
        %p232 = pneg %p231
      $region22: #{tpu_custom_call.1} parent=5 // pred_check_branch
        %234 = sbr.rel (%p232) target = $region24
      $region23: #{tpu_custom_call.1} parent=5 // pred_region
        // Predicated region
        $region25: #{tpu_custom_call.1} parent=23 // pred_check
          %p235 = pneg %p55
        $region26: #{tpu_custom_call.1} parent=23 // pred_check_branch
          %237 = sbr.rel (%p235) target = $region28
        $region27: #{tpu_custom_call.1} parent=23 // pred_region
          %p238 = scmp.lt.s32.totalorder %s21, 1
          %s239 = scalar_select %p238, %s21, 1
          %p240 = scmp.lt.s32.totalorder %s23, 17
          %s241 = scalar_select %p240, %s23, 17
          %s242 = smul.addr %s241, 3
          %s243 = smul.addr %s239, 54
          %s244 = sadd.s32 %s242, %s243
          %s245 = smul.addr %s244, 8
          %s246 = scalar_lea.vmem %s0, %s245
        $region28: #{tpu_custom_call.1} parent=23 // pred_fallthru
          _
        // Predicated region
        $region29: #{tpu_custom_call.1} parent=23 // pred_check
          %p247 = pneg %p85
        $region30: #{tpu_custom_call.1} parent=23 // pred_check_branch
          %249 = sbr.rel (%p247) target = $region32
        $region31: #{tpu_custom_call.1} parent=23 // pred_region
          %s250 = sadd.s32 %s23, 1
          %p251 = scmp.lt.s32.totalorder %s21, 1
          %s252 = scalar_select %p251, %s21, 1
          %p253 = scmp.lt.s32.totalorder %s250, 17
          %s254 = scalar_select %p253, %s250, 17
          %s255 = smul.addr %s254, 3
          %s256 = smul.addr %s252, 54
          %s257 = sadd.s32 %s255, %s256
          %s258 = smul.addr %s257, 8
          %s259 = scalar_lea.vmem %s1, %s258
          %s260 = sadd.s32 %s23, 1
        $region32: #{tpu_custom_call.1} parent=23 // pred_fallthru
          _
        // Predicated region
        $region33: #{tpu_custom_call.1} parent=23 // pred_check
          %p261 = pneg %p115
        $region34: #{tpu_custom_call.1} parent=23 // pred_check_branch
          %263 = sbr.rel (%p261) target = $region36
        $region35: #{tpu_custom_call.1} parent=23 // pred_region
          %s264 = sadd.s32 %s23, 2
          %p265 = scmp.lt.s32.totalorder %s21, 1
          %s266 = scalar_select %p265, %s21, 1
          %p267 = scmp.lt.s32.totalorder %s264, 17
          %s268 = scalar_select %p267, %s264, 17
          %s269 = smul.addr %s268, 3
          %s270 = smul.addr %s266, 54
          %s271 = sadd.s32 %s269, %s270
          %s272 = smul.addr %s271, 8
          %s273 = scalar_lea.vmem %s2, %s272
          %s274 = sadd.s32 %s23, 2
        $region36: #{tpu_custom_call.1} parent=23 // pred_fallthru
          _
      $region24: #{tpu_custom_call.1} parent=5 // pred_fallthru
        _
      %p275 = scmp.le.s32.totalorder 1, %s14
      %p276 = scmp.lt.s32.totalorder %s14, 33
      %p277 = pnand %p275, %p276
      %p278 = pneg %p277
      // Predicated region
      $region37: #{tpu_custom_call.1} parent=5 // pred_check
        _
      $region38: #{tpu_custom_call.1} parent=5 // pred_check_branch
        %280 = sbr.rel (%p277) target = $region40
      $region39: #{tpu_custom_call.1} parent=5 // pred_region
        %s281 = ssub.s32 %s14, 1
        %p282 = scmp.lt.s32.totalorder %s24, 1
        %s283 = scalar_select %p282, %s24, 1
        %p284 = scmp.lt.s32.totalorder %s26, 17
        %s285 = scalar_select %p284, %s26, 17
        %s286 = smul.addr %s285, 3
        %s287 = smul.addr %s283, 54
        %s288 = sadd.s32 %s286, %s287
        %s289 = smul.addr %s288, 8
        %s290 = scalar_lea.vmem %s0, %s289
        %p291 = pneg %p61
        %p292 = pneg %p58
        %s293 = sadd.s32 %s26, 1
        %p294 = scmp.lt.s32.totalorder %s24, 1
        %s295 = scalar_select %p294, %s24, 1
        %p296 = scmp.lt.s32.totalorder %s293, 17
        %s297 = scalar_select %p296, %s293, 17
        %s298 = smul.addr %s297, 3
        %s299 = smul.addr %s295, 54
        %s300 = sadd.s32 %s298, %s299
        %s301 = smul.addr %s300, 8
        %s302 = scalar_lea.vmem %s1, %s301
        %p303 = pneg %p91
        %p304 = pneg %p88
        %s305 = sadd.s32 %s26, 2
        %p306 = scmp.lt.s32.totalorder %s24, 1
        %s307 = scalar_select %p306, %s24, 1
        %p308 = scmp.lt.s32.totalorder %s305, 17
        %s309 = scalar_select %p308, %s305, 17
        %s310 = smul.addr %s309, 3
        %s311 = smul.addr %s307, 54
        %s312 = sadd.s32 %s310, %s311
        %s313 = smul.addr %s312, 8
        %s314 = scalar_lea.vmem %s2, %s313
        %p315 = pneg %p121
        %p316 = pneg %p118
        %p317 = scmp.lt.s32.totalorder %s25, 0
        %s318 = scalar_select %p317, %s25, 0
        %s319 = smul.addr %s318, 8
        %s320 = scalar_lea.vmem %s3, %s319
        %p321 = pneg %p147
        %p322 = pneg %p144
        %p323 = scmp.lt.s32.totalorder %s25, 0
        %s324 = scalar_select %p323, %s25, 0
        %s325 = scalar_lea.vmem %s4, %s324
        %p326 = pneg %p173
        %p327 = pneg %p170
        %p328 = pneg %p203
        %p329 = pneg %p200
        %s330 = sand.u32 %s190, 1
        %s331 = scalar_lea.sflag [#allocation3], %s330
        %s332 = sand.u32 %s190, 1
        %s333 = smul.addr %s332, 16
        %s334 = scalar_lea.vmem [#allocation2], %s333
        %p335 = scmp.lt.s32.totalorder %s24, 1
        %s336 = scalar_select %p335, %s24, 1
        %p337 = scmp.lt.s32.totalorder %s26, 17
        %s338 = scalar_select %p337, %s26, 17
        %s339 = smul.addr %s338, 3
        %s340 = smul.addr %s336, 54
        %s341 = sadd.s32 %s339, %s340
        %s342 = smul.addr %s341, 8
        %s343 = scalar_lea.vmem %s0, %s342
        %s344 = sadd.s32 %s26, 1
        %p345 = scmp.lt.s32.totalorder %s24, 1
        %s346 = scalar_select %p345, %s24, 1
        %p347 = scmp.lt.s32.totalorder %s344, 17
        %s348 = scalar_select %p347, %s344, 17
        %s349 = smul.addr %s348, 3
        %s350 = smul.addr %s346, 54
        %s351 = sadd.s32 %s349, %s350
        %s352 = smul.addr %s351, 8
        %s353 = scalar_lea.vmem %s1, %s352
        %s354 = sadd.s32 %s26, 1
        %s355 = sadd.s32 %s26, 2
        %p356 = scmp.lt.s32.totalorder %s24, 1
        %s357 = scalar_select %p356, %s24, 1
        %p358 = scmp.lt.s32.totalorder %s355, 17
        %s359 = scalar_select %p358, %s355, 17
        %s360 = smul.addr %s359, 3
        %s361 = smul.addr %s357, 54
        %s362 = sadd.s32 %s360, %s361
        %s363 = smul.addr %s362, 8
        %s364 = scalar_lea.vmem %s2, %s363
        %s365 = sadd.s32 %s26, 2
        %p366 = scmp.lt.s32.totalorder %s25, 0
        %s367 = scalar_select %p366, %s25, 0
        %s368 = smul.addr %s367, 8
        %s369 = scalar_lea.vmem %s3, %s368
        %p370 = scmp.lt.s32.totalorder %s25, 0
        %s371 = scalar_select %p370, %s25, 0
        %s372 = scalar_lea.vmem %s4, %s371
        %v373 = vld [vmem:[%s372] sm:$0x1]
        %v375 = vlaneseq
        %v376 = vshrl.u32 %v375, 7
        %v377 = vsub.s32 0, %v376
        %v378 = vrot.slane %v373, %v377
        %v380 = vld [vmem:[%s343] sm:$0xff]
        %v381 = vld [vmem:[%s343 + $0x8] sm:$0xff]
        %v382 = vld [vmem:[%s343 + $0x10] sm:$0x3]
        %v383 = vld [vmem:[%s369] sm:$0xff]
        %vm384 = vcmask 64512
        %v386 = vsel %vm384, %v380, 0
        %v389 = vsel %vm384, %v381, 0
        %391 = vmatprep.subr.mxu0 0.0
        %392 = vmatpush1.msra.mxu0 %v383
        %393 = vmatprep.subr.mxu0 0.0
        %394 = vmatpush1.msra.mxu0 0.0
        %395 = vmatprep.subr.mxu0 0.0
        %396 = vmatpush1.msra.mxu0 0.0
        %397 = vmatprep.subr.mxu0 0.0
        %398 = vmatpush1.msra.mxu0 0.0
        %399 = vmatprep.subr.mxu0 0.0
        %400 = vmatpush1.msra.mxu0 0.0
        %401 = vmatprep.subr.mxu0 0.0
        %402 = vmatpush1.msra.mxu0 0.0
        %403 = vmatprep.subr.mxu0 0.0
        %404 = vmatpush1.msra.mxu0 0.0
        %405 = vmatprep.subr.mxu0 0.0
        %406 = vmatpush1.msra.mxu0 0.0
        %407 = vmatprep.subr.mxu0 0.0
        %408 = vmatpush1.msra.mxu0 0.0
        %409 = vmatprep.subr.mxu0 0.0
        %410 = vmatpush1.msra.mxu0 0.0
        %411 = vmatprep.subr.mxu0 0.0
        %412 = vmatpush1.msra.mxu0 0.0
        %413 = vmatprep.subr.mxu0 0.0
        %414 = vmatpush1.msra.mxu0 0.0
        %415 = vmatprep.subr.mxu0 0.0
        %416 = vmatpush1.msra.mxu0 0.0
        %417 = vmatprep.subr.mxu0 0.0
        %418 = vmatpush1.msra.mxu0 0.0
        %419 = vmatprep.subr.mxu0 0.0
        %420 = vmatpush1.msra.mxu0 0.0
        %421 = vmatprep.subr.mxu0 0.0
        %422 = vmatpush1.msra.mxu0 0.0
        %423 = vmatprep.subr.mxu0 0.0
        %424 = vmatpush1.msra.mxu0 0.0
        %425 = vmatprep.subr.mxu0 0.0
        %426 = vmatpush1.msra.mxu0 0.0
        %427 = vmatprep.subr.mxu0 0.0
        %428 = vmatpush1.msra.mxu0 0.0
        %429 = vmatprep.subr.mxu0 0.0
        %430 = vmatpush1.msra.mxu0 0.0
        %431 = vmatprep.subr.mxu0 0.0
        %432 = vmatpush1.msra.mxu0 0.0
        %433 = vmatprep.subr.mxu0 0.0
        %434 = vmatpush1.msra.mxu0 0.0
        %435 = vmatprep.subr.mxu0 0.0
        %436 = vmatpush1.msra.mxu0 0.0
        %437 = vmatprep.subr.mxu0 0.0
        %438 = vmatpush1.msra.mxu0 0.0
        %439 = vmatprep.subr.mxu0 0.0
        %440 = vmatpush1.msra.mxu0 0.0
        %441 = vmatprep.subr.mxu0 0.0
        %442 = vmatpush1.msra.mxu0 0.0
        %443 = vmatprep.subr.mxu0 0.0
        %444 = vmatpush1.msra.mxu0 0.0
        %445 = vmatprep.subr.mxu0 0.0
        %446 = vmatpush1.msra.mxu0 0.0
        %447 = vmatprep.subr.mxu0 0.0
        %448 = vmatpush1.msra.mxu0 0.0
        %449 = vmatprep.subr.mxu0 0.0
        %450 = vmatpush1.msra.mxu0 0.0
        %451 = vmatprep.subr.mxu0 0.0
        %452 = vmatpush1.msra.mxu0 0.0
        %453 = vmatprep.subr.mxu0 0.0
        %454 = vmatpush1.msra.mxu0 0.0
        %455 = vmatprep.mubr.f32.mxu0 0.0
        %456 = vmatmul.mubr.f32.gmra.mrb[0].mxu0 %v386
        %v457 = vpop.f32.mrb[0].mxu0
        %v458 = vadd.f32 0.0, %v457
        %v459 = vpop.f32.mrb[0].mxu0
        %460 = vmatprep.mubr.f32.mxu0 0.0
        %461 = vmatmul.mubr.f32.gmra.mrb[0].mxu0 %v389
        %v462 = vpop.f32.mrb[0].mxu0
        %v463 = vadd.f32 0.0, %v462
        %v464 = vpop.f32.mrb[0].mxu0
        %465 = vdwg.mxu0
        %v466 = vadd.f32 %v378, %v458
        %v467 = vadd.f32 %v378, %v463
        %s468 = scalar_lea.vmem %s369, 8
        %v469 = vld [vmem:[%s468] sm:$0xff]
        %vm471 = vcmask 1046528
        %v472 = vrot.slane %v380, 1
        %v473 = vrot.slane %v381, 1
        %v474 = vsel %vm471, %v472, %v473
        %v475 = vrot.slane %v382, 1
        %v476 = vsel %vm471, %v473, %v475
        %v477 = vsel %vm384, %v474, 0
        %v479 = vsel %vm384, %v476, 0
        %481 = vmatprep.subr.mxu0 0.0
        %482 = vmatpush1.msra.mxu0 %v469
        %483 = vmatprep.subr.mxu0 0.0
        %484 = vmatpush1.msra.mxu0 0.0
        %485 = vmatprep.subr.mxu0 0.0
        %486 = vmatpush1.msra.mxu0 0.0
        %487 = vmatprep.subr.mxu0 0.0
        %488 = vmatpush1.msra.mxu0 0.0
        %489 = vmatprep.subr.mxu0 0.0
        %490 = vmatpush1.msra.mxu0 0.0
        %491 = vmatprep.subr.mxu0 0.0
        %492 = vmatpush1.msra.mxu0 0.0
        %493 = vmatprep.subr.mxu0 0.0
        %494 = vmatpush1.msra.mxu0 0.0
        %495 = vmatprep.subr.mxu0 0.0
        %496 = vmatpush1.msra.mxu0 0.0
        %497 = vmatprep.subr.mxu0 0.0
        %498 = vmatpush1.msra.mxu0 0.0
        %499 = vmatprep.subr.mxu0 0.0
        %500 = vmatpush1.msra.mxu0 0.0
        %501 = vmatprep.subr.mxu0 0.0
        %502 = vmatpush1.msra.mxu0 0.0
        %503 = vmatprep.subr.mxu0 0.0
        %504 = vmatpush1.msra.mxu0 0.0
        %505 = vmatprep.subr.mxu0 0.0
        %506 = vmatpush1.msra.mxu0 0.0
        %507 = vmatprep.subr.mxu0 0.0
        %508 = vmatpush1.msra.mxu0 0.0
        %509 = vmatprep.subr.mxu0 0.0
        %510 = vmatpush1.msra.mxu0 0.0
        %511 = vmatprep.subr.mxu0 0.0
        %512 = vmatpush1.msra.mxu0 0.0
        %513 = vmatprep.subr.mxu0 0.0
        %514 = vmatpush1.msra.mxu0 0.0
        %515 = vmatprep.subr.mxu0 0.0
        %516 = vmatpush1.msra.mxu0 0.0
        %517 = vmatprep.subr.mxu0 0.0
        %518 = vmatpush1.msra.mxu0 0.0
        %519 = vmatprep.subr.mxu0 0.0
        %520 = vmatpush1.msra.mxu0 0.0
        %521 = vmatprep.subr.mxu0 0.0
        %522 = vmatpush1.msra.mxu0 0.0
        %523 = vmatprep.subr.mxu0 0.0
        %524 = vmatpush1.msra.mxu0 0.0
        %525 = vmatprep.subr.mxu0 0.0
        %526 = vmatpush1.msra.mxu0 0.0
        %527 = vmatprep.subr.mxu0 0.0
        %528 = vmatpush1.msra.mxu0 0.0
        %529 = vmatprep.subr.mxu0 0.0
        %530 = vmatpush1.msra.mxu0 0.0
        %531 = vmatprep.subr.mxu0 0.0
        %532 = vmatpush1.msra.mxu0 0.0
        %533 = vmatprep.subr.mxu0 0.0
        %534 = vmatpush1.msra.mxu0 0.0
        %535 = vmatprep.subr.mxu0 0.0
        %536 = vmatpush1.msra.mxu0 0.0
        %537 = vmatprep.subr.mxu0 0.0
        %538 = vmatpush1.msra.mxu0 0.0
        %539 = vmatprep.subr.mxu0 0.0
        %540 = vmatpush1.msra.mxu0 0.0
        %541 = vmatprep.subr.mxu0 0.0
        %542 = vmatpush1.msra.mxu0 0.0
        %543 = vmatprep.subr.mxu0 0.0
        %544 = vmatpush1.msra.mxu0 0.0
        %545 = vmatprep.mubr.f32.mxu0 0.0
        %546 = vmatmul.mubr.f32.gmra.mrb[0].mxu0 %v477
        %v547 = vpop.f32.mrb[0].mxu0
        %v548 = vadd.f32 0.0, %v547
        %v549 = vpop.f32.mrb[0].mxu0
        %550 = vmatprep.mubr.f32.mxu0 0.0
        %551 = vmatmul.mubr.f32.gmra.mrb[0].mxu0 %v479
        %v552 = vpop.f32.mrb[0].mxu0
        %v553 = vadd.f32 0.0, %v552
        %v554 = vpop.f32.mrb[0].mxu0
        %555 = vdwg.mxu0
        %v556 = vadd.f32 %v466, %v548
        %v557 = vadd.f32 %v467, %v553
        %s558 = scalar_lea.vmem %s369, 16
        %v559 = vld [vmem:[%s558] sm:$0xff]
        %vm560 = vcmask 1045504
        %v561 = vrot.slane %v380, 2
        %v562 = vrot.slane %v381, 2
        %v563 = vsel %vm560, %v561, %v562
        %v564 = vrot.slane %v382, 2
        %v565 = vsel %vm560, %v562, %v564
        %v566 = vsel %vm384, %v563, 0
        %v568 = vsel %vm384, %v565, 0
        %570 = vmatprep.subr.mxu0 0.0
        %571 = vmatpush1.msra.mxu0 %v559
        %572 = vmatprep.subr.mxu0 0.0
        %573 = vmatpush1.msra.mxu0 0.0
        %574 = vmatprep.subr.mxu0 0.0
        %575 = vmatpush1.msra.mxu0 0.0
        %576 = vmatprep.subr.mxu0 0.0
        %577 = vmatpush1.msra.mxu0 0.0
        %578 = vmatprep.subr.mxu0 0.0
        %579 = vmatpush1.msra.mxu0 0.0
        %580 = vmatprep.subr.mxu0 0.0
        %581 = vmatpush1.msra.mxu0 0.0
        %582 = vmatprep.subr.mxu0 0.0
        %583 = vmatpush1.msra.mxu0 0.0
        %584 = vmatprep.subr.mxu0 0.0
        %585 = vmatpush1.msra.mxu0 0.0
        %586 = vmatprep.subr.mxu0 0.0
        %587 = vmatpush1.msra.mxu0 0.0
        %588 = vmatprep.subr.mxu0 0.0
        %589 = vmatpush1.msra.mxu0 0.0
        %590 = vmatprep.subr.mxu0 0.0
        %591 = vmatpush1.msra.mxu0 0.0
        %592 = vmatprep.subr.mxu0 0.0
        %593 = vmatpush1.msra.mxu0 0.0
        %594 = vmatprep.subr.mxu0 0.0
        %595 = vmatpush1.msra.mxu0 0.0
        %596 = vmatprep.subr.mxu0 0.0
        %597 = vmatpush1.msra.mxu0 0.0
        %598 = vmatprep.subr.mxu0 0.0
        %599 = vmatpush1.msra.mxu0 0.0
        %600 = vmatprep.subr.mxu0 0.0
        %601 = vmatpush1.msra.mxu0 0.0
        %602 = vmatprep.subr.mxu0 0.0
        %603 = vmatpush1.msra.mxu0 0.0
        %604 = vmatprep.subr.mxu0 0.0
        %605 = vmatpush1.msra.mxu0 0.0
        %606 = vmatprep.subr.mxu0 0.0
        %607 = vmatpush1.msra.mxu0 0.0
        %608 = vmatprep.subr.mxu0 0.0
        %609 = vmatpush1.msra.mxu0 0.0
        %610 = vmatprep.subr.mxu0 0.0
        %611 = vmatpush1.msra.mxu0 0.0
        %612 = vmatprep.subr.mxu0 0.0
        %613 = vmatpush1.msra.mxu0 0.0
        %614 = vmatprep.subr.mxu0 0.0
        %615 = vmatpush1.msra.mxu0 0.0
        %616 = vmatprep.subr.mxu0 0.0
        %617 = vmatpush1.msra.mxu0 0.0
        %618 = vmatprep.subr.mxu0 0.0
        %619 = vmatpush1.msra.mxu0 0.0
        %620 = vmatprep.subr.mxu0 0.0
        %621 = vmatpush1.msra.mxu0 0.0
        %622 = vmatprep.subr.mxu0 0.0
        %623 = vmatpush1.msra.mxu0 0.0
        %624 = vmatprep.subr.mxu0 0.0
        %625 = vmatpush1.msra.mxu0 0.0
        %626 = vmatprep.subr.mxu0 0.0
        %627 = vmatpush1.msra.mxu0 0.0
        %628 = vmatprep.subr.mxu0 0.0
        %629 = vmatpush1.msra.mxu0 0.0
        %630 = vmatprep.subr.mxu0 0.0
        %631 = vmatpush1.msra.mxu0 0.0
        %632 = vmatprep.subr.mxu0 0.0
        %633 = vmatpush1.msra.mxu0 0.0
        %634 = vmatprep.mubr.f32.mxu0 0.0
        %635 = vmatmul.mubr.f32.gmra.mrb[0].mxu0 %v566
        %v636 = vpop.f32.mrb[0].mxu0
        %v637 = vadd.f32 0.0, %v636
        %v638 = vpop.f32.mrb[0].mxu0
        %639 = vmatprep.mubr.f32.mxu0 0.0
        %640 = vmatmul.mubr.f32.gmra.mrb[0].mxu0 %v568
        %v641 = vpop.f32.mrb[0].mxu0
        %v642 = vadd.f32 0.0, %v641
        %v643 = vpop.f32.mrb[0].mxu0
        %644 = vdwg.mxu0
        %v645 = vadd.f32 %v556, %v637
        %v646 = vadd.f32 %v557, %v642
        %v647 = vld [vmem:[%s353] sm:$0xff]
        %v648 = vld [vmem:[%s353 + $0x8] sm:$0xff]
        %v649 = vld [vmem:[%s353 + $0x10] sm:$0x3]
        %s650 = scalar_lea.vmem %s369, 24
        %v651 = vld [vmem:[%s650] sm:$0xff]
        %v653 = vsel %vm384, %v647, 0
        %v656 = vsel %vm384, %v648, 0
        %658 = vmatprep.subr.mxu0 0.0
        %659 = vmatpush1.msra.mxu0 %v651
        %660 = vmatprep.subr.mxu0 0.0
        %661 = vmatpush1.msra.mxu0 0.0
        %662 = vmatprep.subr.mxu0 0.0
        %663 = vmatpush1.msra.mxu0 0.0
        %664 = vmatprep.subr.mxu0 0.0
        %665 = vmatpush1.msra.mxu0 0.0
        %666 = vmatprep.subr.mxu0 0.0
        %667 = vmatpush1.msra.mxu0 0.0
        %668 = vmatprep.subr.mxu0 0.0
        %669 = vmatpush1.msra.mxu0 0.0
        %670 = vmatprep.subr.mxu0 0.0
        %671 = vmatpush1.msra.mxu0 0.0
        %672 = vmatprep.subr.mxu0 0.0
        %673 = vmatpush1.msra.mxu0 0.0
        %674 = vmatprep.subr.mxu0 0.0
        %675 = vmatpush1.msra.mxu0 0.0
        %676 = vmatprep.subr.mxu0 0.0
        %677 = vmatpush1.msra.mxu0 0.0
        %678 = vmatprep.subr.mxu0 0.0
        %679 = vmatpush1.msra.mxu0 0.0
        %680 = vmatprep.subr.mxu0 0.0
        %681 = vmatpush1.msra.mxu0 0.0
        %682 = vmatprep.subr.mxu0 0.0
        %683 = vmatpush1.msra.mxu0 0.0
        %684 = vmatprep.subr.mxu0 0.0
        %685 = vmatpush1.msra.mxu0 0.0
        %686 = vmatprep.subr.mxu0 0.0
        %687 = vmatpush1.msra.mxu0 0.0
        %688 = vmatprep.subr.mxu0 0.0
        %689 = vmatpush1.msra.mxu0 0.0
        %690 = vmatprep.subr.mxu0 0.0
        %691 = vmatpush1.msra.mxu0 0.0
        %692 = vmatprep.subr.mxu0 0.0
        %693 = vmatpush1.msra.mxu0 0.0
        %694 = vmatprep.subr.mxu0 0.0
        %695 = vmatpush1.msra.mxu0 0.0
        %696 = vmatprep.subr.mxu0 0.0
        %697 = vmatpush1.msra.mxu0 0.0
        %698 = vmatprep.subr.mxu0 0.0
        %699 = vmatpush1.msra.mxu0 0.0
        %700 = vmatprep.subr.mxu0 0.0
        %701 = vmatpush1.msra.mxu0 0.0
        %702 = vmatprep.subr.mxu0 0.0
        %703 = vmatpush1.msra.mxu0 0.0
        %704 = vmatprep.subr.mxu0 0.0
        %705 = vmatpush1.msra.mxu0 0.0
        %706 = vmatprep.subr.mxu0 0.0
        %707 = vmatpush1.msra.mxu0 0.0
        %708 = vmatprep.subr.mxu0 0.0
        %709 = vmatpush1.msra.mxu0 0.0
        %710 = vmatprep.subr.mxu0 0.0
        %711 = vmatpush1.msra.mxu0 0.0
        %712 = vmatprep.subr.mxu0 0.0
        %713 = vmatpush1.msra.mxu0 0.0
        %714 = vmatprep.subr.mxu0 0.0
        %715 = vmatpush1.msra.mxu0 0.0
        %716 = vmatprep.subr.mxu0 0.0
        %717 = vmatpush1.msra.mxu0 0.0
        %718 = vmatprep.subr.mxu0 0.0
        %719 = vmatpush1.msra.mxu0 0.0
        %720 = vmatprep.subr.mxu0 0.0
        %721 = vmatpush1.msra.mxu0 0.0
        %722 = vmatprep.mubr.f32.mxu0 0.0
        %723 = vmatmul.mubr.f32.gmra.mrb[0].mxu0 %v653
        %v724 = vpop.f32.mrb[0].mxu0
        %v725 = vadd.f32 0.0, %v724
        %v726 = vpop.f32.mrb[0].mxu0
        %727 = vmatprep.mubr.f32.mxu0 0.0
        %728 = vmatmul.mubr.f32.gmra.mrb[0].mxu0 %v656
        %v729 = vpop.f32.mrb[0].mxu0
        %v730 = vadd.f32 0.0, %v729
        %v731 = vpop.f32.mrb[0].mxu0
        %732 = vdwg.mxu0
        %v733 = vadd.f32 %v645, %v725
        %v734 = vadd.f32 %v646, %v730
        %s735 = scalar_lea.vmem %s369, 32
        %v736 = vld [vmem:[%s735] sm:$0xff]
        %v738 = vrot.slane %v647, 1
        %v739 = vrot.slane %v648, 1
        %v740 = vsel %vm471, %v738, %v739
        %v741 = vrot.slane %v649, 1
        %v742 = vsel %vm471, %v739, %v741
        %v743 = vsel %vm384, %v740, 0
        %v745 = vsel %vm384, %v742, 0
        %747 = vmatprep.subr.mxu0 0.0
        %748 = vmatpush1.msra.mxu0 %v736
        %749 = vmatprep.subr.mxu0 0.0
        %750 = vmatpush1.msra.mxu0 0.0
        %751 = vmatprep.subr.mxu0 0.0
        %752 = vmatpush1.msra.mxu0 0.0
        %753 = vmatprep.subr.mxu0 0.0
        %754 = vmatpush1.msra.mxu0 0.0
        %755 = vmatprep.subr.mxu0 0.0
        %756 = vmatpush1.msra.mxu0 0.0
        %757 = vmatprep.subr.mxu0 0.0
        %758 = vmatpush1.msra.mxu0 0.0
        %759 = vmatprep.subr.mxu0 0.0
        %760 = vmatpush1.msra.mxu0 0.0
        %761 = vmatprep.subr.mxu0 0.0
        %762 = vmatpush1.msra.mxu0 0.0
        %763 = vmatprep.subr.mxu0 0.0
        %764 = vmatpush1.msra.mxu0 0.0
        %765 = vmatprep.subr.mxu0 0.0
        %766 = vmatpush1.msra.mxu0 0.0
        %767 = vmatprep.subr.mxu0 0.0
        %768 = vmatpush1.msra.mxu0 0.0
        %769 = vmatprep.subr.mxu0 0.0
        %770 = vmatpush1.msra.mxu0 0.0
        %771 = vmatprep.subr.mxu0 0.0
        %772 = vmatpush1.msra.mxu0 0.0
        %773 = vmatprep.subr.mxu0 0.0
        %774 = vmatpush1.msra.mxu0 0.0
        %775 = vmatprep.subr.mxu0 0.0
        %776 = vmatpush1.msra.mxu0 0.0
        %777 = vmatprep.subr.mxu0 0.0
        %778 = vmatpush1.msra.mxu0 0.0
        %779 = vmatprep.subr.mxu0 0.0
        %780 = vmatpush1.msra.mxu0 0.0
        %781 = vmatprep.subr.mxu0 0.0
        %782 = vmatpush1.msra.mxu0 0.0
        %783 = vmatprep.subr.mxu0 0.0
        %784 = vmatpush1.msra.mxu0 0.0
        %785 = vmatprep.subr.mxu0 0.0
        %786 = vmatpush1.msra.mxu0 0.0
        %787 = vmatprep.subr.mxu0 0.0
        %788 = vmatpush1.msra.mxu0 0.0
        %789 = vmatprep.subr.mxu0 0.0
        %790 = vmatpush1.msra.mxu0 0.0
        %791 = vmatprep.subr.mxu0 0.0
        %792 = vmatpush1.msra.mxu0 0.0
        %793 = vmatprep.subr.mxu0 0.0
        %794 = vmatpush1.msra.mxu0 0.0
        %795 = vmatprep.subr.mxu0 0.0
        %796 = vmatpush1.msra.mxu0 0.0
        %797 = vmatprep.subr.mxu0 0.0
        %798 = vmatpush1.msra.mxu0 0.0
        %799 = vmatprep.subr.mxu0 0.0
        %800 = vmatpush1.msra.mxu0 0.0
        %801 = vmatprep.subr.mxu0 0.0
        %802 = vmatpush1.msra.mxu0 0.0
        %803 = vmatprep.subr.mxu0 0.0
        %804 = vmatpush1.msra.mxu0 0.0
        %805 = vmatprep.subr.mxu0 0.0
        %806 = vmatpush1.msra.mxu0 0.0
        %807 = vmatprep.subr.mxu0 0.0
        %808 = vmatpush1.msra.mxu0 0.0
        %809 = vmatprep.subr.mxu0 0.0
        %810 = vmatpush1.msra.mxu0 0.0
        %811 = vmatprep.mubr.f32.mxu0 0.0
        %812 = vmatmul.mubr.f32.gmra.mrb[0].mxu0 %v743
        %v813 = vpop.f32.mrb[0].mxu0
        %v814 = vadd.f32 0.0, %v813
        %v815 = vpop.f32.mrb[0].mxu0
        %816 = vmatprep.mubr.f32.mxu0 0.0
        %817 = vmatmul.mubr.f32.gmra.mrb[0].mxu0 %v745
        %v818 = vpop.f32.mrb[0].mxu0
        %v819 = vadd.f32 0.0, %v818
        %v820 = vpop.f32.mrb[0].mxu0
        %821 = vdwg.mxu0
        %v822 = vadd.f32 %v733, %v814
        %v823 = vadd.f32 %v734, %v819
        %s824 = scalar_lea.vmem %s369, 40
        %v825 = vld [vmem:[%s824] sm:$0xff]
        %v826 = vrot.slane %v647, 2
        %v827 = vrot.slane %v648, 2
        %v828 = vsel %vm560, %v826, %v827
        %v829 = vrot.slane %v649, 2
        %v830 = vsel %vm560, %v827, %v829
        %v831 = vsel %vm384, %v828, 0
        %v833 = vsel %vm384, %v830, 0
        %835 = vmatprep.subr.mxu0 0.0
        %836 = vmatpush1.msra.mxu0 %v825
        %837 = vmatprep.subr.mxu0 0.0
        %838 = vmatpush1.msra.mxu0 0.0
        %839 = vmatprep.subr.mxu0 0.0
        %840 = vmatpush1.msra.mxu0 0.0
        %841 = vmatprep.subr.mxu0 0.0
        %842 = vmatpush1.msra.mxu0 0.0
        %843 = vmatprep.subr.mxu0 0.0
        %844 = vmatpush1.msra.mxu0 0.0
        %845 = vmatprep.subr.mxu0 0.0
        %846 = vmatpush1.msra.mxu0 0.0
        %847 = vmatprep.subr.mxu0 0.0
        %848 = vmatpush1.msra.mxu0 0.0
        %849 = vmatprep.subr.mxu0 0.0
        %850 = vmatpush1.msra.mxu0 0.0
        %851 = vmatprep.subr.mxu0 0.0
        %852 = vmatpush1.msra.mxu0 0.0
        %853 = vmatprep.subr.mxu0 0.0
        %854 = vmatpush1.msra.mxu0 0.0
        %855 = vmatprep.subr.mxu0 0.0
        %856 = vmatpush1.msra.mxu0 0.0
        %857 = vmatprep.subr.mxu0 0.0
        %858 = vmatpush1.msra.mxu0 0.0
        %859 = vmatprep.subr.mxu0 0.0
        %860 = vmatpush1.msra.mxu0 0.0
        %861 = vmatprep.subr.mxu0 0.0
        %862 = vmatpush1.msra.mxu0 0.0
        %863 = vmatprep.subr.mxu0 0.0
        %864 = vmatpush1.msra.mxu0 0.0
        %865 = vmatprep.subr.mxu0 0.0
        %866 = vmatpush1.msra.mxu0 0.0
        %867 = vmatprep.subr.mxu0 0.0
        %868 = vmatpush1.msra.mxu0 0.0
        %869 = vmatprep.subr.mxu0 0.0
        %870 = vmatpush1.msra.mxu0 0.0
        %871 = vmatprep.subr.mxu0 0.0
        %872 = vmatpush1.msra.mxu0 0.0
        %873 = vmatprep.subr.mxu0 0.0
        %874 = vmatpush1.msra.mxu0 0.0
        %875 = vmatprep.subr.mxu0 0.0
        %876 = vmatpush1.msra.mxu0 0.0
        %877 = vmatprep.subr.mxu0 0.0
        %878 = vmatpush1.msra.mxu0 0.0
        %879 = vmatprep.subr.mxu0 0.0
        %880 = vmatpush1.msra.mxu0 0.0
        %881 = vmatprep.subr.mxu0 0.0
        %882 = vmatpush1.msra.mxu0 0.0
        %883 = vmatprep.subr.mxu0 0.0
        %884 = vmatpush1.msra.mxu0 0.0
        %885 = vmatprep.subr.mxu0 0.0
        %886 = vmatpush1.msra.mxu0 0.0
        %887 = vmatprep.subr.mxu0 0.0
        %888 = vmatpush1.msra.mxu0 0.0
        %889 = vmatprep.subr.mxu0 0.0
        %890 = vmatpush1.msra.mxu0 0.0
        %891 = vmatprep.subr.mxu0 0.0
        %892 = vmatpush1.msra.mxu0 0.0
        %893 = vmatprep.subr.mxu0 0.0
        %894 = vmatpush1.msra.mxu0 0.0
        %895 = vmatprep.subr.mxu0 0.0
        %896 = vmatpush1.msra.mxu0 0.0
        %897 = vmatprep.subr.mxu0 0.0
        %898 = vmatpush1.msra.mxu0 0.0
        %899 = vmatprep.mubr.f32.mxu0 0.0
        %900 = vmatmul.mubr.f32.gmra.mrb[0].mxu0 %v831
        %v901 = vpop.f32.mrb[0].mxu0
        %v902 = vadd.f32 0.0, %v901
        %v903 = vpop.f32.mrb[0].mxu0
        %904 = vmatprep.mubr.f32.mxu0 0.0
        %905 = vmatmul.mubr.f32.gmra.mrb[0].mxu0 %v833
        %v906 = vpop.f32.mrb[0].mxu0
        %v907 = vadd.f32 0.0, %v906
        %v908 = vpop.f32.mrb[0].mxu0
        %909 = vdwg.mxu0
        %v910 = vadd.f32 %v822, %v902
        %v911 = vadd.f32 %v823, %v907
        %v912 = vld [vmem:[%s364] sm:$0xff]
        %v913 = vld [vmem:[%s364 + $0x8] sm:$0xff]
        %v914 = vld [vmem:[%s364 + $0x10] sm:$0x3]
        %s915 = scalar_lea.vmem %s369, 48
        %v916 = vld [vmem:[%s915] sm:$0xff]
        %v918 = vsel %vm384, %v912, 0
        %v921 = vsel %vm384, %v913, 0
        %923 = vmatprep.subr.mxu0 0.0
        %924 = vmatpush1.msra.mxu0 %v916
        %925 = vmatprep.subr.mxu0 0.0
        %926 = vmatpush1.msra.mxu0 0.0
        %927 = vmatprep.subr.mxu0 0.0
        %928 = vmatpush1.msra.mxu0 0.0
        %929 = vmatprep.subr.mxu0 0.0
        %930 = vmatpush1.msra.mxu0 0.0
        %931 = vmatprep.subr.mxu0 0.0
        %932 = vmatpush1.msra.mxu0 0.0
        %933 = vmatprep.subr.mxu0 0.0
        %934 = vmatpush1.msra.mxu0 0.0
        %935 = vmatprep.subr.mxu0 0.0
        %936 = vmatpush1.msra.mxu0 0.0
        %937 = vmatprep.subr.mxu0 0.0
        %938 = vmatpush1.msra.mxu0 0.0
        %939 = vmatprep.subr.mxu0 0.0
        %940 = vmatpush1.msra.mxu0 0.0
        %941 = vmatprep.subr.mxu0 0.0
        %942 = vmatpush1.msra.mxu0 0.0
        %943 = vmatprep.subr.mxu0 0.0
        %944 = vmatpush1.msra.mxu0 0.0
        %945 = vmatprep.subr.mxu0 0.0
        %946 = vmatpush1.msra.mxu0 0.0
        %947 = vmatprep.subr.mxu0 0.0
        %948 = vmatpush1.msra.mxu0 0.0
        %949 = vmatprep.subr.mxu0 0.0
        %950 = vmatpush1.msra.mxu0 0.0
        %951 = vmatprep.subr.mxu0 0.0
        %952 = vmatpush1.msra.mxu0 0.0
        %953 = vmatprep.subr.mxu0 0.0
        %954 = vmatpush1.msra.mxu0 0.0
        %955 = vmatprep.subr.mxu0 0.0
        %956 = vmatpush1.msra.mxu0 0.0
        %957 = vmatprep.subr.mxu0 0.0
        %958 = vmatpush1.msra.mxu0 0.0
        %959 = vmatprep.subr.mxu0 0.0
        %960 = vmatpush1.msra.mxu0 0.0
        %961 = vmatprep.subr.mxu0 0.0
        %962 = vmatpush1.msra.mxu0 0.0
        %963 = vmatprep.subr.mxu0 0.0
        %964 = vmatpush1.msra.mxu0 0.0
        %965 = vmatprep.subr.mxu0 0.0
        %966 = vmatpush1.msra.mxu0 0.0
        %967 = vmatprep.subr.mxu0 0.0
        %968 = vmatpush1.msra.mxu0 0.0
        %969 = vmatprep.subr.mxu0 0.0
        %970 = vmatpush1.msra.mxu0 0.0
        %971 = vmatprep.subr.mxu0 0.0
        %972 = vmatpush1.msra.mxu0 0.0
        %973 = vmatprep.subr.mxu0 0.0
        %974 = vmatpush1.msra.mxu0 0.0
        %975 = vmatprep.subr.mxu0 0.0
        %976 = vmatpush1.msra.mxu0 0.0
        %977 = vmatprep.subr.mxu0 0.0
        %978 = vmatpush1.msra.mxu0 0.0
        %979 = vmatprep.subr.mxu0 0.0
        %980 = vmatpush1.msra.mxu0 0.0
        %981 = vmatprep.subr.mxu0 0.0
        %982 = vmatpush1.msra.mxu0 0.0
        %983 = vmatprep.subr.mxu0 0.0
        %984 = vmatpush1.msra.mxu0 0.0
        %985 = vmatprep.subr.mxu0 0.0
        %986 = vmatpush1.msra.mxu0 0.0
        %987 = vmatprep.mubr.f32.mxu0 0.0
        %988 = vmatmul.mubr.f32.gmra.mrb[0].mxu0 %v918
        %v989 = vpop.f32.mrb[0].mxu0
        %v990 = vadd.f32 0.0, %v989
        %v991 = vpop.f32.mrb[0].mxu0
        %992 = vmatprep.mubr.f32.mxu0 0.0
        %993 = vmatmul.mubr.f32.gmra.mrb[0].mxu0 %v921
        %v994 = vpop.f32.mrb[0].mxu0
        %v995 = vadd.f32 0.0, %v994
        %v996 = vpop.f32.mrb[0].mxu0
        %997 = vdwg.mxu0
        %v998 = vadd.f32 %v910, %v990
        %v999 = vadd.f32 %v911, %v995
        %s1000 = scalar_lea.vmem %s369, 56
        %v1001 = vld [vmem:[%s1000] sm:$0xff]
        %v1003 = vrot.slane %v912, 1
        %v1004 = vrot.slane %v913, 1
        %v1005 = vsel %vm471, %v1003, %v1004
        %v1006 = vrot.slane %v914, 1
        %v1007 = vsel %vm471, %v1004, %v1006
        %v1008 = vsel %vm384, %v1005, 0
        %v1010 = vsel %vm384, %v1007, 0
        %1012 = vmatprep.subr.mxu0 0.0
        %1013 = vmatpush1.msra.mxu0 %v1001
        %1014 = vmatprep.subr.mxu0 0.0
        %1015 = vmatpush1.msra.mxu0 0.0
        %1016 = vmatprep.subr.mxu0 0.0
        %1017 = vmatpush1.msra.mxu0 0.0
        %1018 = vmatprep.subr.mxu0 0.0
        %1019 = vmatpush1.msra.mxu0 0.0
        %1020 = vmatprep.subr.mxu0 0.0
        %1021 = vmatpush1.msra.mxu0 0.0
        %1022 = vmatprep.subr.mxu0 0.0
        %1023 = vmatpush1.msra.mxu0 0.0
        %1024 = vmatprep.subr.mxu0 0.0
        %1025 = vmatpush1.msra.mxu0 0.0
        %1026 = vmatprep.subr.mxu0 0.0
        %1027 = vmatpush1.msra.mxu0 0.0
        %1028 = vmatprep.subr.mxu0 0.0
        %1029 = vmatpush1.msra.mxu0 0.0
        %1030 = vmatprep.subr.mxu0 0.0
        %1031 = vmatpush1.msra.mxu0 0.0
        %1032 = vmatprep.subr.mxu0 0.0
        %1033 = vmatpush1.msra.mxu0 0.0
        %1034 = vmatprep.subr.mxu0 0.0
        %1035 = vmatpush1.msra.mxu0 0.0
        %1036 = vmatprep.subr.mxu0 0.0
        %1037 = vmatpush1.msra.mxu0 0.0
        %1038 = vmatprep.subr.mxu0 0.0
        %1039 = vmatpush1.msra.mxu0 0.0
        %1040 = vmatprep.subr.mxu0 0.0
        %1041 = vmatpush1.msra.mxu0 0.0
        %1042 = vmatprep.subr.mxu0 0.0
        %1043 = vmatpush1.msra.mxu0 0.0
        %1044 = vmatprep.subr.mxu0 0.0
        %1045 = vmatpush1.msra.mxu0 0.0
        %1046 = vmatprep.subr.mxu0 0.0
        %1047 = vmatpush1.msra.mxu0 0.0
        %1048 = vmatprep.subr.mxu0 0.0
        %1049 = vmatpush1.msra.mxu0 0.0
        %1050 = vmatprep.subr.mxu0 0.0
        %1051 = vmatpush1.msra.mxu0 0.0
        %1052 = vmatprep.subr.mxu0 0.0
        %1053 = vmatpush1.msra.mxu0 0.0
        %1054 = vmatprep.subr.mxu0 0.0
        %1055 = vmatpush1.msra.mxu0 0.0
        %1056 = vmatprep.subr.mxu0 0.0
        %1057 = vmatpush1.msra.mxu0 0.0
        %1058 = vmatprep.subr.mxu0 0.0
        %1059 = vmatpush1.msra.mxu0 0.0
        %1060 = vmatprep.subr.mxu0 0.0
        %1061 = vmatpush1.msra.mxu0 0.0
        %1062 = vmatprep.subr.mxu0 0.0
        %1063 = vmatpush1.msra.mxu0 0.0
        %1064 = vmatprep.subr.mxu0 0.0
        %1065 = vmatpush1.msra.mxu0 0.0
        %1066 = vmatprep.subr.mxu0 0.0
        %1067 = vmatpush1.msra.mxu0 0.0
        %1068 = vmatprep.subr.mxu0 0.0
        %1069 = vmatpush1.msra.mxu0 0.0
        %1070 = vmatprep.subr.mxu0 0.0
        %1071 = vmatpush1.msra.mxu0 0.0
        %1072 = vmatprep.subr.mxu0 0.0
        %1073 = vmatpush1.msra.mxu0 0.0
        %1074 = vmatprep.subr.mxu0 0.0
        %1075 = vmatpush1.msra.mxu0 0.0
        %1076 = vmatprep.mubr.f32.mxu0 0.0
        %1077 = vmatmul.mubr.f32.gmra.mrb[0].mxu0 %v1008
        %v1078 = vpop.f32.mrb[0].mxu0
        %v1079 = vadd.f32 0.0, %v1078
        %v1080 = vpop.f32.mrb[0].mxu0
        %1081 = vmatprep.mubr.f32.mxu0 0.0
        %1082 = vmatmul.mubr.f32.gmra.mrb[0].mxu0 %v1010
        %v1083 = vpop.f32.mrb[0].mxu0
        %v1084 = vadd.f32 0.0, %v1083
        %v1085 = vpop.f32.mrb[0].mxu0
        %1086 = vdwg.mxu0
        %v1087 = vadd.f32 %v998, %v1079
        %v1088 = vadd.f32 %v999, %v1084
        %s1089 = scalar_lea.vmem %s369, 64
        %v1090 = vld [vmem:[%s1089] sm:$0xff]
        %v1091 = vrot.slane %v912, 2
        %v1092 = vrot.slane %v913, 2
        %v1093 = vsel %vm560, %v1091, %v1092
        %v1094 = vrot.slane %v914, 2
        %v1095 = vsel %vm560, %v1092, %v1094
        %v1096 = vsel %vm384, %v1093, 0
        %v1098 = vsel %vm384, %v1095, 0
        %1100 = vmatprep.subr.mxu0 0.0
        %1101 = vmatpush1.msra.mxu0 %v1090
        %1102 = vmatprep.subr.mxu0 0.0
        %1103 = vmatpush1.msra.mxu0 0.0
        %1104 = vmatprep.subr.mxu0 0.0
        %1105 = vmatpush1.msra.mxu0 0.0
        %1106 = vmatprep.subr.mxu0 0.0
        %1107 = vmatpush1.msra.mxu0 0.0
        %1108 = vmatprep.subr.mxu0 0.0
        %1109 = vmatpush1.msra.mxu0 0.0
        %1110 = vmatprep.subr.mxu0 0.0
        %1111 = vmatpush1.msra.mxu0 0.0
        %1112 = vmatprep.subr.mxu0 0.0
        %1113 = vmatpush1.msra.mxu0 0.0
        %1114 = vmatprep.subr.mxu0 0.0
        %1115 = vmatpush1.msra.mxu0 0.0
        %1116 = vmatprep.subr.mxu0 0.0
        %1117 = vmatpush1.msra.mxu0 0.0
        %1118 = vmatprep.subr.mxu0 0.0
        %1119 = vmatpush1.msra.mxu0 0.0
        %1120 = vmatprep.subr.mxu0 0.0
        %1121 = vmatpush1.msra.mxu0 0.0
        %1122 = vmatprep.subr.mxu0 0.0
        %1123 = vmatpush1.msra.mxu0 0.0
        %1124 = vmatprep.subr.mxu0 0.0
        %1125 = vmatpush1.msra.mxu0 0.0
        %1126 = vmatprep.subr.mxu0 0.0
        %1127 = vmatpush1.msra.mxu0 0.0
        %1128 = vmatprep.subr.mxu0 0.0
        %1129 = vmatpush1.msra.mxu0 0.0
        %1130 = vmatprep.subr.mxu0 0.0
        %1131 = vmatpush1.msra.mxu0 0.0
        %1132 = vmatprep.subr.mxu0 0.0
        %1133 = vmatpush1.msra.mxu0 0.0
        %1134 = vmatprep.subr.mxu0 0.0
        %1135 = vmatpush1.msra.mxu0 0.0
        %1136 = vmatprep.subr.mxu0 0.0
        %1137 = vmatpush1.msra.mxu0 0.0
        %1138 = vmatprep.subr.mxu0 0.0
        %1139 = vmatpush1.msra.mxu0 0.0
        %1140 = vmatprep.subr.mxu0 0.0
        %1141 = vmatpush1.msra.mxu0 0.0
        %1142 = vmatprep.subr.mxu0 0.0
        %1143 = vmatpush1.msra.mxu0 0.0
        %1144 = vmatprep.subr.mxu0 0.0
        %1145 = vmatpush1.msra.mxu0 0.0
        %1146 = vmatprep.subr.mxu0 0.0
        %1147 = vmatpush1.msra.mxu0 0.0
        %1148 = vmatprep.subr.mxu0 0.0
        %1149 = vmatpush1.msra.mxu0 0.0
        %1150 = vmatprep.subr.mxu0 0.0
        %1151 = vmatpush1.msra.mxu0 0.0
        %1152 = vmatprep.subr.mxu0 0.0
        %1153 = vmatpush1.msra.mxu0 0.0
        %1154 = vmatprep.subr.mxu0 0.0
        %1155 = vmatpush1.msra.mxu0 0.0
        %1156 = vmatprep.subr.mxu0 0.0
        %1157 = vmatpush1.msra.mxu0 0.0
        %1158 = vmatprep.subr.mxu0 0.0
        %1159 = vmatpush1.msra.mxu0 0.0
        %1160 = vmatprep.subr.mxu0 0.0
        %1161 = vmatpush1.msra.mxu0 0.0
        %1162 = vmatprep.subr.mxu0 0.0
        %1163 = vmatpush1.msra.mxu0 0.0
        %1164 = vmatprep.mubr.f32.mxu0 0.0
        %1165 = vmatmul.mubr.f32.gmra.mrb[0].mxu0 %v1096
        %v1166 = vpop.f32.mrb[0].mxu0
        %v1167 = vadd.f32 0.0, %v1166
        %v1168 = vpop.f32.mrb[0].mxu0
        %1169 = vmatprep.mubr.f32.mxu0 0.0
        %1170 = vmatmul.mubr.f32.gmra.mrb[0].mxu0 %v1098
        %v1171 = vpop.f32.mrb[0].mxu0
        %v1172 = vadd.f32 0.0, %v1171
        %v1173 = vpop.f32.mrb[0].mxu0
        %1174 = vdwg.mxu0
        %v1175 = vadd.f32 %v1087, %v1167
        %v1176 = vadd.f32 %v1088, %v1172
        %1177 = vst [vmem:[%s334] sm:$0xff] %v1175
        %1178 = vst [vmem:[%s334 + $0x8] sm:$0xff] %v1176
        %s1179 = sand.u32 %s190, 1
        %s1180 = scalar_lea.sflag [#allocation3], %s1179
        %s1181 = sand.u32 %s190, 1
        %s1182 = smul.addr %s1181, 16
        %s1183 = scalar_lea.vmem [#allocation2], %s1182
        // Predicated region
        $region41: #{tpu_custom_call.1} parent=39 // pred_check
          %p1184 = pneg %p200
        $region42: #{tpu_custom_call.1} parent=39 // pred_check_branch
          %1186 = sbr.rel (%p1184) target = $region44
        $region43: #{tpu_custom_call.1} parent=39 // pred_region
          %s1188 = ssub.s32 256, 256
          %1189 = vsyncadd %s1180, %s1188
          %s1190 = smul.addr %s26, 2
          %s1191 = sadd.s32 %s25, %s1190
          %s1192 = smul.addr %s24, 32
          %s1193 = sadd.s32 %s1191, %s1192
          %s1194 = smul.addr %s1193, 128
          %s1195 = scalar_lea.hbm %s5, %s1194
          %s1196 = sshll.u32 %s1183, 4
          %s1197 = int_to_ptr.vmem [resolvable:$true] %s1196
          %1202 = dma.vmem_to_hbm [thread:$0]  %s1197, 256, %s1195, %s1180, 128, 128, 8
        $region44: #{tpu_custom_call.1} parent=39 // pred_fallthru
          _
      $region40: #{tpu_custom_call.1} parent=5 // pred_fallthru
        _
      %p1203 = scmp.le.s32.totalorder 2, %s14
      // Predicated region
      $region45: #{tpu_custom_call.1} parent=5 // pred_check
        %p1204 = pneg %p1203
      $region46: #{tpu_custom_call.1} parent=5 // pred_check_branch
        %1206 = sbr.rel (%p1204) target = $region48
      $region47: #{tpu_custom_call.1} parent=5 // pred_region
        %s1207 = ssub.s32 %s14, 2
        // Predicated region
        $region49: #{tpu_custom_call.1} parent=47 // pred_check
          %p1208 = pneg %p206
        $region50: #{tpu_custom_call.1} parent=47 // pred_check_branch
          %1210 = sbr.rel (%p1208) target = $region52
        $region51: #{tpu_custom_call.1} parent=47 // pred_region
          %s1211 = sand.u32 %s191, 1
          %s1212 = scalar_lea.sflag [#allocation3], %s1211
          %s1213 = sand.u32 %s191, 1
          %s1214 = smul.addr %s1213, 16
          %s1215 = scalar_lea.vmem [#allocation2], %s1214
          %1216 = dma.done %s1212, 256
        $region52: #{tpu_custom_call.1} parent=47 // pred_fallthru
          _
      $region48: #{tpu_custom_call.1} parent=5 // pred_fallthru
        _
    $region6: #{tpu_custom_call.1} parent=1 // loop_footer
      %s18 = sadd.s32 1, %s14
    $region7: #{tpu_custom_call.1} parent=1 // loop_footer_branch
      %13 = sbr.rel target = $region3
    $region8: #{tpu_custom_call.1} parent=1 // loop_exit
      _
    %1217 = vsyncpa [#allocation3], 1
    %s1218 = scalar_lea.sflag [#allocation3], 1
    %1219 = vsyncpa %s1218, 1

</llo_original>
